<compile_context>
chip_gen: v6e
topology: v6e:2x2x1
jax: 0.10.0
libtpu: 0.0.40
codegen_flags: <defaults>
</compile_context>

<pallas_src>
import functools

import jax
import jax.numpy as jnp
from jax.experimental import pallas as pl
from jax.experimental.pallas import tpu as pltpu


def _gcn_kernel(adj_ref, sup_ref, b_ref, o_ref, acc_ref, *,
                use_bias, tk, support_resident, compute_dtype):
    """acc[i-tile] += adj[i-tile, k-tile] @ support[k-tile]; bias-add + cast on last k."""
    k = pl.program_id(1)

    @pl.when(k == 0)
    def _():
        acc_ref[...] = jnp.zeros_like(acc_ref)

    # Cast after the DMA (no extra HBM pass in the wrapper); no-op if adj is already bf16.
    adj_blk = adj_ref[...].astype(compute_dtype)
    if support_resident:
        start = pl.multiple_of(k * tk, tk)
        sup_blk = sup_ref[pl.ds(start, tk), :]
    else:
        sup_blk = sup_ref[...]
    acc_ref[...] += jnp.dot(adj_blk, sup_blk, preferred_element_type=jnp.float32)

    @pl.when(k == pl.num_programs(1) - 1)
    def _():
        out = acc_ref[...]
        if use_bias:
            out = out + b_ref[...]
        o_ref[...] = out.astype(o_ref.dtype)


def _pick_tile(dim, pref, align):
    """Largest tile <= pref that divides dim and is a multiple of align, else full dim."""
    if dim <= pref:
        return dim
    t = (pref // align) * align
    while t >= align:
        if dim % t == 0:
            return t
        t -= align
    return dim  # full extent is always a legal block shape


def graph_convolution(x, adj, weight, bias=None, *,
                      tile_m=512, tile_k=1024,
                      compute_dtype=jnp.bfloat16, out_dtype=jnp.float32):
    """x: [N, in_dim], adj: [N, N] (dense), weight: [in_dim, out_dim], bias: [out_dim]|None."""
    N, in_dim = x.shape
    in_dim_w, out_dim = weight.shape
    assert in_dim_w == in_dim and adj.shape == (N, N)
    use_bias = bias is not None

    # support = x @ weight once, in f32, then cast (small: N x out_dim).
    support = jnp.dot(x.astype(jnp.float32), weight.astype(jnp.float32),
                      preferred_element_type=jnp.float32)

    # Pad narrow out_dim up to one full 128-lane vreg for lane-dense stores; strip later.
    out_dim_p = out_dim if out_dim >= 128 else 128
    if out_dim_p != out_dim:
        support = jnp.pad(support, ((0, 0), (0, out_dim_p - out_dim)))
    support = support.astype(compute_dtype)

    b2d = jnp.zeros((1, out_dim_p), jnp.float32)
    if use_bias:
        b2d = b2d.at[0, :out_dim].set(bias.astype(jnp.float32))

    # Tiles: tm aligned to 16 (bf16 sublane packing), capped at ~N//2 so m_tiles >= 2
    # where possible (keeps both v7x TensorCores busy); tk aligned to 128.
    tm_pref = min(tile_m, max(16, N // 2)) if N > 16 else N
    tm = _pick_tile(N, tm_pref, 16)
    tk = _pick_tile(N, tile_k, 128)
    m_tiles, k_tiles = N // tm, N // tk

    sup_itemsize = jnp.dtype(compute_dtype).itemsize
    adj_itemsize = jnp.dtype(adj.dtype).itemsize
    # Keep support fully VMEM-resident (constant index_map, slice by k with pl.ds) when it
    # is small; otherwise stream it by k.
    support_resident = N * out_dim_p * sup_itemsize <= (8 << 20)

    if support_resident:
        sup_spec = pl.BlockSpec((N, out_dim_p), lambda i, k: (0, 0))
        sup_buf = N * out_dim_p * sup_itemsize
    else:
        sup_spec = pl.BlockSpec((tk, out_dim_p), lambda i, k: (k, 0))
        sup_buf = 2 * tk * out_dim_p * sup_itemsize

    in_specs = [
        pl.BlockSpec((tm, tk), lambda i, k: (i, k)),        # adj, streamed (dominant traffic)
        sup_spec,                                           # support
        pl.BlockSpec((1, out_dim_p), lambda i, k: (0, 0)),  # bias (resident)
    ]
    out_spec = pl.BlockSpec((tm, out_dim_p), lambda i, k: (i, 0))

    # VMEM budget from the actual buffers (double-buffered by the pipeline) + headroom.
    buf_bytes = (2 * tm * tk * adj_itemsize      # adj double buffer
                 + tm * tk * sup_itemsize        # bf16-cast temporary of the adj block
                 + 2 * sup_buf                   # support (x2 safety)
                 + 2 * out_dim_p * 4             # bias
                 + 2 * tm * out_dim_p * 4        # output double buffer
                 + tm * out_dim_p * 4)           # f32 accumulator scratch
    vmem_limit = min(max(int(1.5 * buf_bytes) + (8 << 20), 16 << 20), 40 << 20)

    kernel = functools.partial(
        _gcn_kernel, use_bias=use_bias, tk=tk,
        support_resident=support_resident, compute_dtype=compute_dtype)

    out_p = pl.pallas_call(
        kernel,
        out_shape=jax.ShapeDtypeStruct((N, out_dim_p), out_dtype),
        grid_spec=pltpu.PrefetchScalarGridSpec(
            num_scalar_prefetch=0,
            grid=(m_tiles, k_tiles),
            in_specs=in_specs,
            out_specs=out_spec,
            scratch_shapes=[pltpu.VMEM((tm, out_dim_p), jnp.float32)],
        ),
        compiler_params=pltpu.CompilerParams(
            dimension_semantics=("parallel", "arbitrary"),
            vmem_limit_bytes=vmem_limit,
        ),
    )(adj, support, b2d)

    return out_p if out_dim_p == out_dim else out_p[:, :out_dim]


if __name__ == "__main__":
    def make_inputs(key, n, in_dim, out_dim, density=0.1):
        kx, kadj, kw, kb = jax.random.split(key, 4)
        # Mirror reset_parameters(): U(-stdv, stdv), stdv = 1/sqrt(out_dim)
        stdv = 1.0 / (out_dim ** 0.5)
        weight = jax.random.uniform(kw, (in_dim, out_dim), jnp.float32, -stdv, stdv)
        bias = jax.random.uniform(kb, (out_dim,), jnp.float32, -stdv, stdv)
        x = jax.random.normal(kx, (n, in_dim), jnp.float32)
        a = (jax.random.uniform(kadj, (n, n)) < density).astype(jnp.float32)
        a = a + jnp.eye(n, dtype=jnp.float32)
        adj = a / jnp.sum(a, axis=1, keepdims=True)   # row-normalized dense adjacency
        return x, adj, weight, bias

    def reference(x, adj, weight, bias):
        out = adj @ (x @ weight)
        return out if bias is None else out + bias[None, :]

    key = jax.random.PRNGKey(0)
    k1, k2, k3 = jax.random.split(key, 3)

    checks = [
        # (key, N, in_dim, out_dim, use_bias, tile_overrides)
        (k1, 64, 32, 128, True, {}),                              # small shape, single k tile
        (k2, 512, 64, 32, True, dict(tile_m=128, tile_k=128)),    # multi-tile accumulation + out_dim pad
        (k3, 512, 32, 160, False, {}),                            # bias=None, out_dim >= 128 non-multiple
    ]
    for kk, n, di, do, use_bias, tkw in checks:
        x, adj, weight, bias = make_inputs(kk, n, di, do)
        b = bias if use_bias else None
        out = jax.block_until_ready(graph_convolution(x, adj, weight, b, **tkw))
        ref = reference(x, adj, weight, b)
        assert out.shape == (n, do)
        # bf16 adj/support on the MXU vs f32 reference: loose but meaningful tolerance.
        assert jnp.allclose(out, ref, atol=3e-2, rtol=3e-2), \
            f"mismatch vs reference (N={n}, in={di}, out={do}, bias={use_bias})"

    print("KERNEL_OK")
</pallas_src>

<mosaic_0001>
module attributes {stable_mosaic.version = 11 : i64} {
  func.func @_gcn_kernel(%arg0: i32, %arg1: i32, %arg2: memref<32x64xf32, #tpu.memory_space<vmem>>, %arg3: memref<64x128xbf16, #tpu.memory_space<vmem>>, %arg4: memref<1x128xf32, #tpu.memory_space<vmem>>, %arg5: memref<32x128xf32, #tpu.memory_space<vmem>>, %arg6: memref<32x128xf32, #tpu.memory_space<vmem>>) attributes {dimension_semantics = [#tpu.dimension_semantics<parallel>, #tpu.dimension_semantics<arbitrary>], iteration_bounds = array<i64: 2, 1>, scalar_prefetch = 0 : i64, scratch_operands = 1 : i64, tpu.core_type = #tpu.core_type<tc>, window_params = [{transform_indices = @transform_0, window_bounds = array<i64: 32, 64>}, {pipeline_mode = #tpu.pipeline_mode<synchronous>, transform_indices = @transform_1, window_bounds = array<i64: 64, 128>}, {pipeline_mode = #tpu.pipeline_mode<synchronous>, transform_indices = @transform_2, window_bounds = array<i64: 1, 128>}, {transform_indices = @transform_3, window_bounds = array<i64: 32, 128>}]} {
    %c0_i32 = arith.constant 0 : i32
    %0 = arith.cmpi eq, %arg1, %c0_i32 : i32
    %1 = arith.extui %0 : i1 to i32
    %c0_i32_0 = arith.constant 0 : i32
    %2 = arith.cmpi ne, %1, %c0_i32_0 : i32
    scf.if %2 {
      %cst_9 = arith.constant 0.000000e+00 : f32
      %16 = vector.broadcast %cst_9 : f32 to vector<32x128xf32>
      %c0_10 = arith.constant 0 : index
      %c0_11 = arith.constant 0 : index
      %17 = vector.load %arg6[%c0_10, %c0_11] : memref<32x128xf32, #tpu.memory_space<vmem>>, vector<32x128xf32>
      tpu.vector_store %arg6[%c0_10, %c0_11], %16 {strides = array<i32>} : memref<32x128xf32, #tpu.memory_space<vmem>>, vector<32x128xf32>,
    } else {
    }
    %c0 = arith.constant 0 : index
    %c0_1 = arith.constant 0 : index
    %3 = vector.load %arg2[%c0, %c0_1] : memref<32x64xf32, #tpu.memory_space<vmem>>, vector<32x64xf32>
    %4 = arith.truncf %3 : vector<32x64xf32> to vector<32x64xbf16>
    %c64_i32 = arith.constant 64 : i32
    %5 = arith.muli %arg1, %c64_i32 : i32
    %6 = tpu.assume_multiple %5, 64 : i32
    %7 = arith.index_cast %6 : i32 to index
    %c0_2 = arith.constant 0 : index
    %8 = vector.load %arg3[%7, %c0_2] : memref<64x128xbf16, #tpu.memory_space<vmem>>, vector<64x128xbf16>
    %c0_3 = arith.constant 0 : index
    %c0_4 = arith.constant 0 : index
    %9 = vector.load %arg6[%c0_3, %c0_4] : memref<32x128xf32, #tpu.memory_space<vmem>>, vector<32x128xf32>
    %cst = arith.constant dense<0.000000e+00> : vector<32x128xf32>
    %10 = tpu.matmul %4, %8, %cst {dimension_numbers = #tpu.dot_dimension_numbers<[1], [0], [0], [1], [0, 0, 1, 1], [], []>} : vector<32x64xbf16>, vector<64x128xbf16>, vector<32x128xf32> -> vector<32x128xf32>
    %11 = arith.addf %9, %10 : vector<32x128xf32>
    %c0_5 = arith.constant 0 : index
    %c0_6 = arith.constant 0 : index
    %12 = vector.load %arg6[%c0_5, %c0_6] : memref<32x128xf32, #tpu.memory_space<vmem>>, vector<32x128xf32>
    tpu.vector_store %arg6[%c0_5, %c0_6], %11 {strides = array<i32>} : memref<32x128xf32, #tpu.memory_space<vmem>>, vector<32x128xf32>,
    %c0_i32_7 = arith.constant 0 : i32
    %13 = arith.cmpi eq, %arg1, %c0_i32_7 : i32
    %14 = arith.extui %13 : i1 to i32
    %c0_i32_8 = arith.constant 0 : i32
    %15 = arith.cmpi ne, %14, %c0_i32_8 : i32
    scf.if %15 {
      %c0_9 = arith.constant 0 : index
      %c0_10 = arith.constant 0 : index
      %16 = vector.load %arg6[%c0_9, %c0_10] : memref<32x128xf32, #tpu.memory_space<vmem>>, vector<32x128xf32>
      %c0_11 = arith.constant 0 : index
      %c0_12 = arith.constant 0 : index
      %17 = vector.load %arg4[%c0_11, %c0_12] : memref<1x128xf32, #tpu.memory_space<vmem>>, vector<1x128xf32>
      %18 = vector.broadcast %17 : vector<1x128xf32> to vector<32x128xf32>
      %19 = arith.addf %16, %18 : vector<32x128xf32>
      %c0_13 = arith.constant 0 : index
      %c0_14 = arith.constant 0 : index
      %20 = vector.load %arg5[%c0_13, %c0_14] : memref<32x128xf32, #tpu.memory_space<vmem>>, vector<32x128xf32>
      tpu.vector_store %arg5[%c0_13, %c0_14], %19 {strides = array<i32>} : memref<32x128xf32, #tpu.memory_space<vmem>>, vector<32x128xf32>,
    } else {
    }
    return
  }
  func.func @transform_0(%arg0: i32, %arg1: i32) -> (i32, i32) {
    %c0_i32 = arith.constant 0 : i32
    return %arg0, %arg1 : i32, i32
  }
  func.func @transform_1(%arg0: i32, %arg1: i32) -> (i32, i32) {
    %c0_i32 = arith.constant 0 : i32
    %c0_i32_0 = arith.constant 0 : i32
    %c0_i32_1 = arith.constant 0 : i32
    return %c0_i32, %c0_i32_0 : i32, i32
  }
  func.func @transform_2(%arg0: i32, %arg1: i32) -> (i32, i32) {
    %c0_i32 = arith.constant 0 : i32
    %c0_i32_0 = arith.constant 0 : i32
    %c0_i32_1 = arith.constant 0 : i32
    return %c0_i32, %c0_i32_0 : i32, i32
  }
  func.func @transform_3(%arg0: i32, %arg1: i32) -> (i32, i32) {
    %c0_i32 = arith.constant 0 : i32
    %c0_i32_0 = arith.constant 0 : i32
    return %arg0, %c0_i32 : i32, i32
  }
}

</mosaic_0001>

<llo_original>
// kernel: tpu_custom_call.1
$region0: #{tpu_custom_call.1}
  #allocation0 [shape = 'u32[]', space=smem, size = 0x4, offset = 0x4, fixed_abs, tag = 'smem constant byte address 0x4 - core index']
  #allocation1 [shape = 'u32[144,128]{1,0:T(1,128)}', space=vmem, size = 0x12000, scoped, tag = 'internal scratch']
  #allocation2 [shape = 'f32[32,128]{1,0:T(8,128)}', space=vmem, size = 0x4000, scoped, tag = 'scratch operand']
  %s0 = inlined_call_operand.hbm [shape: f32[64,64], index: 0, kind: input, shape index: {}]
  %s1 = inlined_call_operand.hbm [shape: bf16[64,128], index: 1, kind: input, shape index: {}]
  %s2 = inlined_call_operand.vmem [shape: f32[1,128], index: 2, kind: input, shape index: {}]
  %s3 = inlined_call_operand.hbm [shape: f32[64,128], index: 3, kind: output, shape index: {}]
  %s4 = sld [smem:[#allocation0]]
  $region61: #{tpu_custom_call.1} parent=0
    _
  %s6 = ssub.s32 1, %s4
  %s7 = scalar_select 0, %s6, %s4
  $region1: #{tpu_custom_call.1} parent=0
    #allocation3 [shape = 'u8[32768]{0}', space=vmem, size = 0x8000, scoped, tag = 'input window, operand 0']
    #allocation4 [shape = 's32[2]{0}', space=sflag, size = 0x8, scoped, tag = 'scoped memory for tpu_custom_call.1']
    #allocation5 [shape = 's32[2]{0}', space=sflag, size = 0x8, scoped, tag = 'scoped memory for tpu_custom_call.1']
    #allocation6 [shape = 'u8[16384]{0}', space=vmem, size = 0x4000, scoped, tag = 'input window, operand 1, single buffered']
    #allocation7 [shape = 's32[1]{0}', space=sflag, size = 0x4, scoped, tag = 'scoped memory for tpu_custom_call.1']
    #allocation8 [shape = 'u8[32768]{0}', space=vmem, size = 0x8000, scoped, tag = 'output window, operand 0']
    %8 = vsyncpa [#allocation4], 0
    %s9 = scalar_lea.sflag [#allocation4], 1
    %10 = vsyncpa %s9, 0
    %11 = vsyncpa [#allocation7], 0
    %12 = vsyncpa [#allocation5], 0
    %s13 = scalar_lea.sflag [#allocation5], 1
    %14 = vsyncpa %s13, 0
    loop: start=0, step=1, limit=4
    $region2: #{tpu_custom_call.1} parent=1 // loop_pre_header
      _
    $region3: #{tpu_custom_call.1} parent=1 // loop_header
      %s16 = sphi 0, %s20
      %p17 = scmp.ge.s32.totalorder %s16, 4
      %s23 = sphi 0, %s35
      %s24 = sphi 0, %s31
      %s25 = sphi 0, %s23
      %s26 = sphi 0, %s24
      %s27 = sphi 0, %s25
      %s28 = sphi 0, %s26
      %s40 = sphi 0, %s42
      %s43 = sphi 0, %s40
      %s44 = sphi 0, %s43
      %s60 = sphi 0, %s44
      %s64 = sphi 0, %s64
      %s66 = sphi 0, %s64
      %s67 = sphi 0, %s66
      %s81 = sphi 0, %s67
      %s85 = sphi 0, %s85
      %s87 = sphi 0, %s85
      %s88 = sphi 0, %s87
      %s102 = sphi 0, %s88
      %s108 = sphi 0, %s110
      %s111 = sphi 0, %s108
      %s112 = sphi 0, %s111
      %s128 = sphi 0, %s112
    $region4: #{tpu_custom_call.1} parent=1 // loop_header_branch
      %19 = sbr.rel (%p17) target = $region8
    $region5: #{tpu_custom_call.1} parent=1 // loop_body
      %s21 = ssub.s32 %s16, 1
      %s22 = ssub.s32 %s16, 2
      %s29 = sadd.s32 1, %s24
      %p30 = scmp.ge.s32.totalorder %s29, 1
      %s31 = scalar_select %p30, 0, %s29
      %s32 = sadd.s32 1, %s23
      %s33 = scalar_select %p30, %s32, %s23
      %p34 = scmp.ge.s32.totalorder %s33, 2
      %s35 = scalar_select %p34, 0, %s33
      %s36 = ssub.s32 %s23, %s35
      %s37 = ssub.s32 %s24, %s31
      %s38 = sor.u32 %s36, %s37
      %p39 = scmp.eq.s32.totalorder %s38, 0
      %s41 = sadd.s32 %s40, 1
      %s42 = scalar_select %p39, %s40, %s41
      %p45 = pneg %p39
      %p46 = scmp.eq.s32.totalorder %s16, 1
      %p47 = por %p45, %p46
      %p48 = scmp.ne.s32.totalorder %s40, %s43
      %p49 = scmp.eq.s32.totalorder %s16, 0
      %p50 = por %p48, %p49
      %p51 = scmp.ne.s32.totalorder %s40, %s43
      %p52 = scmp.eq.s32.totalorder %s21, 1
      %p53 = por %p51, %p52
      %p54 = scmp.ne.s32.totalorder %s43, %s44
      %p55 = scmp.eq.s32.totalorder %s21, 0
      %p56 = por %p54, %p55
      %p57 = scmp.ne.s32.totalorder %s43, %s44
      %p58 = scmp.eq.s32.totalorder %s22, 1
      %p59 = por %p57, %p58
      %p61 = scmp.ne.s32.totalorder %s44, %s60
      %p62 = scmp.eq.s32.totalorder %s22, 0
      %p63 = por %p61, %p62
      %s65 = sadd.s32 %s64, 1
      %p68 = scmp.eq.s32.totalorder %s16, 1
      %p69 = scmp.ne.s32.totalorder %s64, %s66
      %p70 = scmp.eq.s32.totalorder %s16, 0
      %p71 = por %p69, %p70
      %p72 = scmp.ne.s32.totalorder %s64, %s66
      %p73 = scmp.eq.s32.totalorder %s21, 1
      %p74 = por %p72, %p73
      %p75 = scmp.ne.s32.totalorder %s66, %s67
      %p76 = scmp.eq.s32.totalorder %s21, 0
      %p77 = por %p75, %p76
      %p78 = scmp.ne.s32.totalorder %s66, %s67
      %p79 = scmp.eq.s32.totalorder %s22, 1
      %p80 = por %p78, %p79
      %p82 = scmp.ne.s32.totalorder %s67, %s81
      %p83 = scmp.eq.s32.totalorder %s22, 0
      %p84 = por %p82, %p83
      %s86 = sadd.s32 %s85, 1
      %p89 = scmp.eq.s32.totalorder %s16, 1
      %p90 = scmp.ne.s32.totalorder %s85, %s87
      %p91 = scmp.eq.s32.totalorder %s16, 0
      %p92 = por %p90, %p91
      %p93 = scmp.ne.s32.totalorder %s85, %s87
      %p94 = scmp.eq.s32.totalorder %s21, 1
      %p95 = por %p93, %p94
      %p96 = scmp.ne.s32.totalorder %s87, %s88
      %p97 = scmp.eq.s32.totalorder %s21, 0
      %p98 = por %p96, %p97
      %p99 = scmp.ne.s32.totalorder %s87, %s88
      %p100 = scmp.eq.s32.totalorder %s22, 1
      %p101 = por %p99, %p100
      %p103 = scmp.ne.s32.totalorder %s88, %s102
      %p104 = scmp.eq.s32.totalorder %s22, 0
      %p105 = por %p103, %p104
      %s106 = ssub.s32 %s23, %s35
      %p107 = scmp.eq.s32.totalorder %s106, 0
      %s109 = sadd.s32 %s108, 1
      %s110 = scalar_select %p107, %s108, %s109
      %p113 = pneg %p107
      %p114 = scmp.eq.s32.totalorder %s16, 1
      %p115 = por %p113, %p114
      %p116 = scmp.ne.s32.totalorder %s108, %s111
      %p117 = scmp.eq.s32.totalorder %s16, 0
      %p118 = por %p116, %p117
      %p119 = scmp.ne.s32.totalorder %s108, %s111
      %p120 = scmp.eq.s32.totalorder %s21, 1
      %p121 = por %p119, %p120
      %p122 = scmp.ne.s32.totalorder %s111, %s112
      %p123 = scmp.eq.s32.totalorder %s21, 0
      %p124 = por %p122, %p123
      %p125 = scmp.ne.s32.totalorder %s111, %s112
      %p126 = scmp.eq.s32.totalorder %s22, 1
      %p127 = por %p125, %p126
      %p129 = scmp.ne.s32.totalorder %s112, %s128
      %p130 = scmp.eq.s32.totalorder %s22, 0
      %p131 = por %p129, %p130
      %p132 = scmp.le.s32.totalorder 1, %s16
      %p133 = scmp.lt.s32.totalorder %s16, 3
      %p134 = pnand %p132, %p133
      %p135 = pneg %p134
      // Predicated region
      $region9: #{tpu_custom_call.1} parent=5 // pred_check
        _
      $region10: #{tpu_custom_call.1} parent=5 // pred_check_branch
        %137 = sbr.rel (%p134) target = $region12
      $region11: #{tpu_custom_call.1} parent=5 // pred_region
        %s138 = ssub.s32 %s16, 1
        // Predicated region
        $region13: #{tpu_custom_call.1} parent=11 // pred_check
          %p139 = pneg %p77
        $region14: #{tpu_custom_call.1} parent=11 // pred_check_branch
          %141 = sbr.rel (%p139) target = $region16
        $region15: #{tpu_custom_call.1} parent=11 // pred_region
          %s143 = ssub.s32 512, 512
          %144 = vsyncadd [#allocation7], %s143
          %s145 = sshll.u32 [#allocation6], 4
          %s146 = int_to_ptr.vmem [resolvable:$true] %s145
          %151 = dma.hbm_to_vmem [thread:$0]  %s1, 512, %s146, [#allocation7], 64, 64, 4
        $region16: #{tpu_custom_call.1} parent=11 // pred_fallthru
          _
        // Predicated region
        $region17: #{tpu_custom_call.1} parent=11 // pred_check
          %p152 = pneg %p98
        $region18: #{tpu_custom_call.1} parent=11 // pred_check_branch
          %154 = sbr.rel (%p152) target = $region20
        $region19: #{tpu_custom_call.1} parent=11 // pred_region
          _
        $region20: #{tpu_custom_call.1} parent=11 // pred_fallthru
          _
      $region12: #{tpu_custom_call.1} parent=5 // pred_fallthru
        _
      %p155 = scmp.lt.s32.totalorder %s16, 2
      // Predicated region
      $region21: #{tpu_custom_call.1} parent=5 // pred_check
        %p156 = pneg %p155
      $region22: #{tpu_custom_call.1} parent=5 // pred_check_branch
        %158 = sbr.rel (%p156) target = $region24
      $region23: #{tpu_custom_call.1} parent=5 // pred_region
        // Predicated region
        $region25: #{tpu_custom_call.1} parent=23 // pred_check
          %p159 = pneg %p50
        $region26: #{tpu_custom_call.1} parent=23 // pred_check_branch
          %161 = sbr.rel (%p159) target = $region28
        $region27: #{tpu_custom_call.1} parent=23 // pred_region
          %s162 = sand.u32 %s40, 1
          %s163 = scalar_lea.sflag [#allocation4], %s162
          %s164 = sand.u32 %s40, 1
          %s165 = smul.addr %s164, 32
          %s166 = scalar_lea.vmem [#allocation3], %s165
          %s167 = smul.u32 4, %s23
          %s169 = ssub.s32 512, 512
          %170 = vsyncadd %s163, %s169
          %s171 = sadd.s32 %s24, %s167
          %s172 = smul.addr %s171, 128
          %s173 = scalar_lea.hbm %s0, %s172
          %s174 = sshll.u32 %s166, 4
          %s175 = int_to_ptr.vmem [resolvable:$true] %s174
          %180 = dma.hbm_to_vmem [thread:$0]  %s173, 512, %s175, %s163, 128, 128, 8
        $region28: #{tpu_custom_call.1} parent=23 // pred_fallthru
          _
      $region24: #{tpu_custom_call.1} parent=5 // pred_fallthru
        _
      %p181 = scmp.le.s32.totalorder 1, %s16
      %p182 = scmp.lt.s32.totalorder %s16, 3
      %p183 = pnand %p181, %p182
      %p184 = pneg %p183
      // Predicated region
      $region29: #{tpu_custom_call.1} parent=5 // pred_check
        _
      $region30: #{tpu_custom_call.1} parent=5 // pred_check_branch
        %186 = sbr.rel (%p183) target = $region32
      $region31: #{tpu_custom_call.1} parent=5 // pred_region
        %s187 = ssub.s32 %s16, 1
        %s188 = sand.u32 %s43, 1
        %s189 = scalar_lea.sflag [#allocation4], %s188
        %s190 = sand.u32 %s43, 1
        %s191 = smul.addr %s190, 32
        %s192 = scalar_lea.vmem [#allocation3], %s191
        // Predicated region
        $region33: #{tpu_custom_call.1} parent=31 // pred_check
          %p193 = pneg %p56
        $region34: #{tpu_custom_call.1} parent=31 // pred_check_branch
          %195 = sbr.rel (%p193) target = $region36
        $region35: #{tpu_custom_call.1} parent=31 // pred_region
          %196 = dma.done %s189, 512
        $region36: #{tpu_custom_call.1} parent=31 // pred_fallthru
          _
        // Predicated region
        $region37: #{tpu_custom_call.1} parent=31 // pred_check
          %p197 = pneg %p77
        $region38: #{tpu_custom_call.1} parent=31 // pred_check_branch
          %199 = sbr.rel (%p197) target = $region40
        $region39: #{tpu_custom_call.1} parent=31 // pred_region
          %200 = dma.done [#allocation7], 512
        $region40: #{tpu_custom_call.1} parent=31 // pred_fallthru
          _
        %s201 = sand.u32 %s43, 1
        %s202 = scalar_lea.sflag [#allocation4], %s201
        %s203 = sand.u32 %s43, 1
        %s204 = smul.addr %s203, 32
        %s205 = scalar_lea.vmem [#allocation3], %s204
        %p206 = pneg %p56
        %p207 = pneg %p53
        %p208 = pneg %p77
        %p209 = pneg %p74
        %p210 = pneg %p98
        %p211 = pneg %p95
        %p212 = pneg %p124
        %p213 = pneg %p121
        %s214 = sand.u32 %s111, 1
        %s215 = scalar_lea.sflag [#allocation5], %s214
        %s216 = sand.u32 %s111, 1
        %s217 = smul.addr %s216, 32
        %s218 = scalar_lea.vmem [#allocation8], %s217
        %s219 = smul.u32 4, %s25
        %s220 = smul.u32 4, %s25
        %p222 = scmp.eq.s32.totalorder %s26, 0
        // Predicated region
        $region41: #{tpu_custom_call.1} parent=31 // pred_check
          %p223 = pneg %p222
        $region42: #{tpu_custom_call.1} parent=31 // pred_check_branch
          %225 = sbr.rel (%p223) target = $region44
        $region43: #{tpu_custom_call.1} parent=31 // pred_region
          %226 = vst [vmem:[#allocation2] sm:$0xff] 0.0
          %227 = vst [vmem:[#allocation2 + $0x8] sm:$0xff] 0.0
          %228 = vst [vmem:[#allocation2 + $0x10] sm:$0xff] 0.0
          %229 = vst [vmem:[#allocation2 + $0x18] sm:$0xff] 0.0
        $region44: #{tpu_custom_call.1} parent=31 // pred_fallthru
          _
        %v230 = vld [vmem:[%s192] sm:$0xff]
        %v231 = vld [vmem:[%s192 + $0x8] sm:$0xff]
        %v232 = vld [vmem:[%s192 + $0x10] sm:$0xff]
        %v233 = vld [vmem:[%s192 + $0x18] sm:$0xff]
        %v234 = vpack.c.bf16 %v231, %v230
        %v235 = vpack.c.bf16 %v233, %v232
        %s236 = smul.u32 %s26, 64
        %s237 = sshra.s32 %s236, 3
        %s238 = sand.u32 %s236, 7
        %s239 = smul.addr %s237, 4
        %s240 = scalar_lea.vmem [#allocation6], %s239
        %v241 = vld [vmem:[%s240] sm:$0xf]
        %v242 = vld [vmem:[%s240 + $0x4] sm:$0xf]
        %v243 = vld [vmem:[%s240 + $0x8] sm:$0xf]
        %v244 = vld [vmem:[%s240 + $0xc] sm:$0xf]
        %v245 = vld [vmem:[%s240 + $0x10] sm:$0xf]
        %v246 = vld [vmem:[%s240 + $0x14] sm:$0xf]
        %v247 = vld [vmem:[%s240 + $0x18] sm:$0xf]
        %v248 = vld [vmem:[%s240 + $0x1c] sm:$0xf]
        %v249 = vld [vmem:[#allocation2] sm:$0xff]
        %v250 = vld [vmem:[#allocation2 + $0x8] sm:$0xff]
        %v251 = vld [vmem:[#allocation2 + $0x10] sm:$0xff]
        %v252 = vld [vmem:[#allocation2 + $0x18] sm:$0xff]
        %v261 = vunpack.c.l.b16 %v241
        %v262 = vunpack.c.l.b16 %v242
        %v263 = vunpack.c.l.b16 %v243
        %v264 = vunpack.c.l.b16 %v244
        %v265 = vunpack.c.l.b16 %v245
        %v266 = vunpack.c.l.b16 %v246
        %v267 = vunpack.c.l.b16 %v247
        %v268 = vunpack.c.l.b16 %v248
        %v269 = vpack.c.b16 %v262, %v261
        %v270 = vpack.c.b16 %v264, %v263
        %v271 = vpack.c.b16 %v266, %v265
        %v272 = vpack.c.b16 %v268, %v267
        %vm277 = vcmask 523264
        %v279 = vsel %vm277, %v234, 0
        %v282 = vsel %vm277, %v235, 0
        %284 = vmatprep.subr.bf16.mxu0 0
        %285 = vmatpush1.bf16.msra.mxu0 0
        %286 = vmatprep.subr.bf16.mxu0 0
        %287 = vmatpush1.bf16.msra.mxu0 0
        %288 = vmatprep.subr.bf16.mxu0 0
        %289 = vmatpush1.bf16.msra.mxu0 0
        %290 = vmatprep.subr.bf16.mxu0 0
        %291 = vmatpush1.bf16.msra.mxu0 0
        %292 = vmatprep.subr.bf16.mxu0 0
        %293 = vmatpush1.bf16.msra.mxu0 %v272
        %294 = vmatprep.subr.bf16.mxu0 0
        %295 = vmatpush1.bf16.msra.mxu0 %v271
        %296 = vmatprep.subr.bf16.mxu0 0
        %297 = vmatpush1.bf16.msra.mxu0 %v270
        %298 = vmatprep.subr.bf16.mxu0 0
        %299 = vmatpush1.bf16.msra.mxu0 %v269
        %300 = vmatprep.subr.bf16.mxu0 0
        %301 = vmatpush2.bf16.msra.mxu0 0
        %302 = vmatprep.subr.bf16.mxu0 0
        %303 = vmatpush2.bf16.msra.mxu0 0
        %304 = vmatprep.subr.bf16.mxu0 0
        %305 = vmatpush2.bf16.msra.mxu0 0
        %306 = vmatprep.subr.bf16.mxu0 0
        %307 = vmatpush2.bf16.msra.mxu0 0
        %308 = vmatprep.subr.bf16.mxu0 0
        %309 = vmatpush2.bf16.msra.mxu0 0
        %310 = vmatprep.subr.bf16.mxu0 0
        %311 = vmatpush2.bf16.msra.mxu0 0
        %312 = vmatprep.subr.bf16.mxu0 0
        %313 = vmatpush2.bf16.msra.mxu0 0
        %314 = vmatprep.subr.bf16.mxu0 0
        %315 = vmatpush2.bf16.msra.mxu0 0
        %316 = vmatprep.mubr.bf16.mxu0 0
        %317 = vmatmul.mubr.bf16.gmra.mxu0 %v279
        %v318 = vpop.f32.mrf.mxu0
        %v319 = vadd.f32 0.0, %v318
        %v320 = vpop.f32.mrf.mxu0
        %v321 = vpop.f32.mrf.mxu0
        %v322 = vadd.f32 0.0, %v321
        %v323 = vpop.f32.mrf.mxu0
        %324 = vmatprep.mubr.bf16.mxu0 0
        %325 = vmatmul.mubr.bf16.gmra.mxu0 %v282
        %v326 = vpop.f32.mrf.mxu0
        %v327 = vadd.f32 0.0, %v326
        %v328 = vpop.f32.mrf.mxu0
        %v329 = vpop.f32.mrf.mxu0
        %v330 = vadd.f32 0.0, %v329
        %v331 = vpop.f32.mrf.mxu0
        %332 = vdwg.mxu0
        %v333 = vadd.f32 %v249, %v319
        %v334 = vadd.f32 %v250, %v322
        %v335 = vadd.f32 %v251, %v327
        %v336 = vadd.f32 %v252, %v330
        %337 = vst [vmem:[#allocation2] sm:$0xff] %v333
        %338 = vst [vmem:[#allocation2 + $0x8] sm:$0xff] %v334
        %339 = vst [vmem:[#allocation2 + $0x10] sm:$0xff] %v335
        %340 = vst [vmem:[#allocation2 + $0x18] sm:$0xff] %v336
        // Predicated region
        $region45: #{tpu_custom_call.1} parent=31 // pred_check
          %p341 = pneg %p222
        $region46: #{tpu_custom_call.1} parent=31 // pred_check_branch
          %343 = sbr.rel (%p341) target = $region48
        $region47: #{tpu_custom_call.1} parent=31 // pred_region
          %v344 = vld [vmem:[#allocation2] sm:$0xff]
          %v345 = vld [vmem:[#allocation2 + $0x8] sm:$0xff]
          %v346 = vld [vmem:[#allocation2 + $0x10] sm:$0xff]
          %v347 = vld [vmem:[#allocation2 + $0x18] sm:$0xff]
          %v348 = vld [vmem:[%s2] sm:$0x1]
          %v350 = vlaneseq
          %v351 = vshrl.u32 %v350, 7
          %v352 = vsub.s32 0, %v351
          %v353 = vrot.slane %v348, %v352
          %v355 = vadd.f32 %v344, %v353
          %v356 = vadd.f32 %v345, %v353
          %v357 = vadd.f32 %v346, %v353
          %v358 = vadd.f32 %v347, %v353
          %359 = vst [vmem:[%s218] sm:$0xff] %v355
          %360 = vst [vmem:[%s218 + $0x8] sm:$0xff] %v356
          %361 = vst [vmem:[%s218 + $0x10] sm:$0xff] %v357
          %362 = vst [vmem:[%s218 + $0x18] sm:$0xff] %v358
        $region48: #{tpu_custom_call.1} parent=31 // pred_fallthru
          _
        %s363 = sand.u32 %s111, 1
        %s364 = scalar_lea.sflag [#allocation5], %s363
        %s365 = sand.u32 %s111, 1
        %s366 = smul.addr %s365, 32
        %s367 = scalar_lea.vmem [#allocation8], %s366
        // Predicated region
        $region49: #{tpu_custom_call.1} parent=31 // pred_check
          %p368 = pneg %p121
        $region50: #{tpu_custom_call.1} parent=31 // pred_check_branch
          %370 = sbr.rel (%p368) target = $region52
        $region51: #{tpu_custom_call.1} parent=31 // pred_region
          %s371 = smul.u32 4, %s25
          %s373 = ssub.s32 512, 512
          %374 = vsyncadd %s364, %s373
          %s375 = smul.addr %s371, 128
          %s376 = scalar_lea.hbm %s3, %s375
          %s377 = sshll.u32 %s367, 4
          %s378 = int_to_ptr.vmem [resolvable:$true] %s377
          %383 = dma.vmem_to_hbm [thread:$0]  %s378, 512, %s376, %s364, 128, 128, 8
        $region52: #{tpu_custom_call.1} parent=31 // pred_fallthru
          _
      $region32: #{tpu_custom_call.1} parent=5 // pred_fallthru
        _
      %p384 = scmp.le.s32.totalorder 2, %s16
      // Predicated region
      $region53: #{tpu_custom_call.1} parent=5 // pred_check
        %p385 = pneg %p384
      $region54: #{tpu_custom_call.1} parent=5 // pred_check_branch
        %387 = sbr.rel (%p385) target = $region56
      $region55: #{tpu_custom_call.1} parent=5 // pred_region
        %s388 = ssub.s32 %s16, 2
        // Predicated region
        $region57: #{tpu_custom_call.1} parent=55 // pred_check
          %p389 = pneg %p127
        $region58: #{tpu_custom_call.1} parent=55 // pred_check_branch
          %391 = sbr.rel (%p389) target = $region60
        $region59: #{tpu_custom_call.1} parent=55 // pred_region
          %s392 = sand.u32 %s112, 1
          %s393 = scalar_lea.sflag [#allocation5], %s392
          %s394 = sand.u32 %s112, 1
          %s395 = smul.addr %s394, 32
          %s396 = scalar_lea.vmem [#allocation8], %s395
          %397 = dma.done %s393, 512
        $region60: #{tpu_custom_call.1} parent=55 // pred_fallthru
          _
      $region56: #{tpu_custom_call.1} parent=5 // pred_fallthru
        _
    $region6: #{tpu_custom_call.1} parent=1 // loop_footer
      %s20 = sadd.s32 1, %s16
    $region7: #{tpu_custom_call.1} parent=1 // loop_footer_branch
      %15 = sbr.rel target = $region3
    $region8: #{tpu_custom_call.1} parent=1 // loop_exit
      _
    %398 = vsyncpa [#allocation4], 1
    %s399 = scalar_lea.sflag [#allocation4], 1
    %400 = vsyncpa %s399, 1
    %401 = vsyncpa [#allocation7], 1
    %402 = vsyncpa [#allocation5], 1
    %s403 = scalar_lea.sflag [#allocation5], 1
    %404 = vsyncpa %s403, 1

</llo_original>
